<compile_context>
chip_gen: v7x
topology: tpu7x:2x2x1
jax: 0.10.0
libtpu: 0.0.40
codegen_flags: <defaults>
</compile_context>

<pallas_src>
import functools

import jax
import jax.numpy as jnp
from jax.experimental import pallas as pl
from jax.experimental.pallas import tpu as pltpu

EPS = 1e-5  # layer_norm_eps passed to BatchNorm1d in the PyTorch module


def _round_up(x: int, m: int) -> int:
    return (x + m - 1) // m * m


def featlayer_kernel(x_ref, w_ref, bgb_ref, mask_ref, alpha_ref, o_ref, *,
                     n_tokens: int, has_pad_rows: bool):
    # x_ref:     (N_pad, K)   VMEM, resident across the channel grid
    # w_ref:     (K, TN)      VMEM, streamed channel tile of W^T
    # bgb_ref:   (3, TN)      VMEM, fused [bias; gamma; beta] channel tile
    # mask_ref:  (N_pad, 1)   VMEM, 1.0 for real tokens, 0.0 for pad rows
    # alpha_ref: (1, 1)       SMEM, PReLU scalar slope
    # o_ref:     (N_pad, TN)  VMEM

    bgb = bgb_ref[...]                               # (3, TN)
    bias = bgb[0:1, :]
    gamma = bgb[1:2, :]
    beta = bgb[2:3, :]

    # --- Linear (MXU) ---
    y = jnp.dot(x_ref[...], w_ref[...],
                preferred_element_type=jnp.float32) + bias

    # --- BatchNorm1d batch statistics over the token axis (VPU/XLU sublane
    #     sums; the MXU slot is reserved for the Linear matmul) ---
    inv_n = jnp.float32(1.0 / n_tokens)
    if has_pad_rows:
        m = mask_ref[...]                            # (N_pad, 1)
        mean = jnp.sum(y * m, axis=0, keepdims=True) * inv_n
        diff = y - mean
        var = jnp.sum(diff * diff * m, axis=0, keepdims=True) * inv_n
    else:
        mean = jnp.sum(y, axis=0, keepdims=True) * inv_n
        diff = y - mean
        var = jnp.sum(diff * diff, axis=0, keepdims=True) * inv_n

    # --- Fold BN into a single per-channel affine: z = y*scale + shift ---
    scale = gamma * jax.lax.rsqrt(var + EPS)         # biased variance (PyTorch norm path)
    shift = beta - mean * scale
    z = y * scale + shift

    # --- PReLU (single learnable slope), no predicate + select ---
    alpha = alpha_ref[0, 0]
    o_ref[...] = (jnp.maximum(z, 0.0) + alpha * jnp.minimum(z, 0.0)).astype(o_ref.dtype)


def _block_vmem_bytes(n_pad: int, k: int, tn: int, mm_bytes: int, out_bytes: int) -> int:
    return (
        2 * n_pad * k * mm_bytes        # x (Pallas double-buffers even with a constant index_map)
        + 2 * n_pad * 4                 # token mask column
        + 2 * k * tn * mm_bytes         # double-buffered W^T channel tile
        + 2 * n_pad * tn * out_bytes    # double-buffered output tile
        + 2 * 3 * tn * 4                # double-buffered fused bias/gamma/beta tile
        + 4 * n_pad * tn * 4            # live f32 intermediates (y, diff, diff^2, z)
    )


def feat_layer(x, w, b, gamma, beta, alpha, *, tn: int | None = None,
               matmul_dtype=jnp.bfloat16, out_dtype=jnp.float32):
    """x: (B, S, d_in); w: (d_out, d_in); b/gamma/beta: (d_out,); alpha: scalar.

    bf16 MXU operands are the default (bf16 is MXU-native on v5e/v6e/v7x and
    halves x/W DMA bytes); BN / PReLU math stays f32 regardless. Pass
    matmul_dtype=jnp.float32 when bit-tight numerics are required.
    """
    B, S, d_in = x.shape
    d_out = w.shape[0]
    N = B * S

    mm_bytes = jnp.dtype(matmul_dtype).itemsize
    out_bytes = jnp.dtype(out_dtype).itemsize
    sub_align = 8 if mm_bytes >= 4 else (16 if mm_bytes == 2 else 32)
    N_pad = _round_up(N, sub_align)
    has_pad_rows = N_pad != N

    # --- generation-aware VMEM budget (64 MiB/TC on v7x, 128 MiB v5e/v6e) ---
    try:
        vmem_cap = int(pltpu.get_tpu_info().vmem_capacity_bytes)
    except Exception:
        vmem_cap = 64 << 20                       # conservative fallback
    vmem_budget = vmem_cap - (8 << 20)            # headroom

    if tn is None:
        tn = 256 if d_out >= 256 else 128         # fill the 256-wide MXU when d_out allows
        if tn == 256 and _block_vmem_bytes(N_pad, d_in, 256, mm_bytes, out_bytes) > vmem_budget:
            tn = 128
    d_out_pad = _round_up(d_out, tn)

    block_bytes = _block_vmem_bytes(N_pad, d_in, tn, mm_bytes, out_bytes)
    if block_bytes > vmem_budget:
        # TODO(synk): two-pass token-tiled BN (accumulate per-channel sums in
        # VMEM scratch, then a normalize+PReLU pass) when x cannot stay resident.
        raise ValueError("x block too large to stay resident in VMEM; needs 2-pass token-tiled BN")
    vmem_limit = int(min(vmem_cap, max(block_bytes + (4 << 20), 32 << 20)))

    # --- operands (only pad/copy when actually needed) ---
    x2 = x.reshape(N, d_in).astype(matmul_dtype)
    if has_pad_rows:
        x2 = jnp.zeros((N_pad, d_in), matmul_dtype).at[:N, :].set(x2)

    wt = jnp.asarray(w, matmul_dtype).T                         # (d_in, d_out)
    if d_out_pad != d_out:
        wt = jnp.zeros((d_in, d_out_pad), matmul_dtype).at[:, :d_out].set(wt)

    bgb = jnp.zeros((3, d_out_pad), jnp.float32)
    bgb = bgb.at[0, :d_out].set(jnp.asarray(b, jnp.float32))
    bgb = bgb.at[1, :d_out].set(jnp.asarray(gamma, jnp.float32))
    bgb = bgb.at[2, :d_out].set(jnp.asarray(beta, jnp.float32))

    mask = jnp.zeros((N_pad, 1), jnp.float32).at[:N, 0].set(1.0)
    a2 = jnp.asarray(alpha, jnp.float32).reshape(1, 1)

    grid = (d_out_pad // tn,)

    cost = pl.CostEstimate(
        flops=2 * N_pad * d_in * d_out_pad + 8 * N_pad * d_out_pad,
        transcendentals=d_out_pad,                      # rsqrt per channel
        bytes_accessed=(N_pad * d_in + d_in * d_out_pad) * mm_bytes
        + N_pad * d_out_pad * out_bytes,
    )

    out = pl.pallas_call(
        functools.partial(featlayer_kernel, n_tokens=N, has_pad_rows=has_pad_rows),
        out_shape=jax.ShapeDtypeStruct((N_pad, d_out_pad), out_dtype),
        grid=grid,
        in_specs=[
            pl.BlockSpec((N_pad, d_in), lambda j: (0, 0)),     # x: resident, full-K block
            pl.BlockSpec((d_in, tn), lambda j: (0, j)),        # W^T channel tile
            pl.BlockSpec((3, tn), lambda j: (0, j)),           # fused bias/gamma/beta tile
            pl.BlockSpec((N_pad, 1), lambda j: (0, 0)),        # token mask column: resident
            pl.BlockSpec((1, 1), lambda j: (0, 0),
                         memory_space=pltpu.MemorySpace.SMEM),  # PReLU alpha
        ],
        out_specs=pl.BlockSpec((N_pad, tn), lambda j: (0, j)),
        compiler_params=pltpu.CompilerParams(
            dimension_semantics=("parallel",),
            vmem_limit_bytes=vmem_limit,
        ),
        cost_estimate=cost,
    )(x2, wt, bgb, mask, a2)

    return out[:N, :d_out].reshape(B, S, d_out)


def feat_layer_ref(x, w, b, gamma, beta, alpha):
    """Pure-JAX reference mirroring the PyTorch forward (training-mode BN, no dropout)."""
    y = jnp.einsum("bsd,od->bso", x, w) + b                       # Linear
    mean = jnp.mean(y, axis=(0, 1), keepdims=True)                # BN over (B, S)
    var = jnp.mean((y - mean) ** 2, axis=(0, 1), keepdims=True)   # biased
    y_hat = (y - mean) / jnp.sqrt(var + EPS)
    z = gamma * y_hat + beta
    return jnp.where(z >= 0.0, z, alpha * z)                      # PReLU


if __name__ == "__main__":
    # Small shapes implied by the forward: (batch, seq, d_input) -> (batch, seq, d_output)
    B, S, D_IN, D_OUT = 2, 8, 32, 64

    key = jax.random.PRNGKey(0)
    kx, kw, kb = jax.random.split(key, 3)

    x = jax.random.normal(kx, (B, S, D_IN), dtype=jnp.float32)

    # Deterministic parameter init (shapes follow nn.Linear / BatchNorm1d / PReLU defaults)
    w = jax.random.normal(kw, (D_OUT, D_IN), dtype=jnp.float32) * (1.0 / jnp.sqrt(D_IN))
    b = jax.random.normal(kb, (D_OUT,), dtype=jnp.float32) * 0.01
    gamma = jnp.ones((D_OUT,), dtype=jnp.float32)   # BN weight default
    beta = jnp.zeros((D_OUT,), dtype=jnp.float32)   # BN bias default
    alpha = jnp.float32(0.25)                       # PReLU init

    ref = feat_layer_ref(x, w, b, gamma, beta, alpha)

    # f32 MXU path: tight tolerance.
    out_f32 = feat_layer(x, w, b, gamma, beta, alpha, matmul_dtype=jnp.float32)
    out_f32 = jax.block_until_ready(out_f32)
    assert out_f32.shape == (B, S, D_OUT)
    assert jnp.allclose(out_f32, ref, atol=1e-4, rtol=1e-4), "f32 mismatch vs. reference"

    # bf16 MXU path (production default): looser tolerance for bf16 Linear rounding.
    out_bf16 = feat_layer(x, w, b, gamma, beta, alpha)
    out_bf16 = jax.block_until_ready(out_bf16)
    assert out_bf16.shape == (B, S, D_OUT)
    assert jnp.allclose(out_bf16, ref, atol=1e-1, rtol=1e-1), "bf16 mismatch vs. reference"

    print("KERNEL_OK")
</pallas_src>

<mosaic_0001>
module attributes {stable_mosaic.version = 11 : i64} {
  func.func @featlayer_kernel(%arg0: i32, %arg1: memref<16x32xf32, #tpu.memory_space<vmem>>, %arg2: memref<32x128xf32, #tpu.memory_space<vmem>>, %arg3: memref<3x128xf32, #tpu.memory_space<vmem>>, %arg4: memref<16x1xf32, #tpu.memory_space<vmem>>, %arg5: memref<1x1xf32, #tpu.memory_space<smem>>, %arg6: memref<16x128xf32, #tpu.memory_space<vmem>>) attributes {dimension_semantics = [#tpu.dimension_semantics<parallel>], iteration_bounds = array<i64: 1>, scalar_prefetch = 0 : i64, scratch_operands = 0 : i64, tpu.core_type = #tpu.core_type<tc>, window_params = [{pipeline_mode = #tpu.pipeline_mode<synchronous>, transform_indices = @transform_0, window_bounds = array<i64: 16, 32>}, {transform_indices = @transform_1, window_bounds = array<i64: 32, 128>}, {transform_indices = @transform_2, window_bounds = array<i64: 3, 128>}, {pipeline_mode = #tpu.pipeline_mode<synchronous>, transform_indices = @transform_3, window_bounds = array<i64: 16, 1>}, {transform_indices = @transform_4, window_bounds = array<i64: 1, 1>}, {transform_indices = @transform_5, window_bounds = array<i64: 16, 128>}]} {
    %c0 = arith.constant 0 : index
    %c0_0 = arith.constant 0 : index
    %0 = vector.load %arg3[%c0, %c0_0] : memref<3x128xf32, #tpu.memory_space<vmem>>, vector<3x128xf32>
    %1 = vector.extract_strided_slice %0 {offsets = [0, 0], sizes = [1, 128], strides = [1, 1]} : vector<3x128xf32> to vector<1x128xf32>
    %2 = vector.extract_strided_slice %0 {offsets = [1, 0], sizes = [1, 128], strides = [1, 1]} : vector<3x128xf32> to vector<1x128xf32>
    %3 = vector.extract_strided_slice %0 {offsets = [2, 0], sizes = [1, 128], strides = [1, 1]} : vector<3x128xf32> to vector<1x128xf32>
    %c0_1 = arith.constant 0 : index
    %c0_2 = arith.constant 0 : index
    %4 = vector.load %arg1[%c0_1, %c0_2] : memref<16x32xf32, #tpu.memory_space<vmem>>, vector<16x32xf32>
    %c0_3 = arith.constant 0 : index
    %c0_4 = arith.constant 0 : index
    %5 = vector.load %arg2[%c0_3, %c0_4] : memref<32x128xf32, #tpu.memory_space<vmem>>, vector<32x128xf32>
    %cst = arith.constant dense<0.000000e+00> : vector<16x128xf32>
    %6 = tpu.matmul %4, %5, %cst {dimension_numbers = #tpu.dot_dimension_numbers<[1], [0], [0], [1], [0, 0, 1, 1], [], []>} : vector<16x32xf32>, vector<32x128xf32>, vector<16x128xf32> -> vector<16x128xf32>
    %7 = vector.broadcast %1 : vector<1x128xf32> to vector<16x128xf32>
    %8 = arith.addf %6, %7 : vector<16x128xf32>
    %cst_5 = arith.constant dense<0.000000e+00> : vector<128xf32>
    %9 = vector.multi_reduction <add>, %8, %cst_5 [0] : vector<16x128xf32> to vector<128xf32>
    %10 = vector.shape_cast %9 : vector<128xf32> to vector<1x128xf32>
    %cst_6 = arith.constant 6.250000e-02 : f32
    %11 = vector.broadcast %cst_6 : f32 to vector<1x128xf32>
    %12 = arith.mulf %10, %11 : vector<1x128xf32>
    %13 = vector.broadcast %12 : vector<1x128xf32> to vector<16x128xf32>
    %14 = arith.subf %8, %13 : vector<16x128xf32>
    %15 = arith.mulf %14, %14 : vector<16x128xf32>
    %cst_7 = arith.constant dense<0.000000e+00> : vector<128xf32>
    %16 = vector.multi_reduction <add>, %15, %cst_7 [0] : vector<16x128xf32> to vector<128xf32>
    %17 = vector.shape_cast %16 : vector<128xf32> to vector<1x128xf32>
    %cst_8 = arith.constant 6.250000e-02 : f32
    %18 = vector.broadcast %cst_8 : f32 to vector<1x128xf32>
    %19 = arith.mulf %17, %18 : vector<1x128xf32>
    %cst_9 = arith.constant 9.99999974E-6 : f32
    %20 = vector.broadcast %cst_9 : f32 to vector<1x128xf32>
    %21 = arith.addf %19, %20 : vector<1x128xf32>
    %22 = math.rsqrt %21 : vector<1x128xf32>
    %23 = arith.mulf %2, %22 : vector<1x128xf32>
    %24 = arith.mulf %12, %23 : vector<1x128xf32>
    %25 = arith.subf %3, %24 : vector<1x128xf32>
    %26 = vector.broadcast %23 : vector<1x128xf32> to vector<16x128xf32>
    %27 = arith.mulf %8, %26 : vector<16x128xf32>
    %28 = vector.broadcast %25 : vector<1x128xf32> to vector<16x128xf32>
    %29 = arith.addf %27, %28 : vector<16x128xf32>
    %c0_10 = arith.constant 0 : index
    %c0_11 = arith.constant 0 : index
    %30 = memref.load %arg5[%c0_10, %c0_11] : memref<1x1xf32, #tpu.memory_space<smem>>
    %cst_12 = arith.constant 0.000000e+00 : f32
    %31 = vector.broadcast %cst_12 : f32 to vector<16x128xf32>
    %32 = arith.maximumf %29, %31 : vector<16x128xf32>
    %cst_13 = arith.constant 0.000000e+00 : f32
    %33 = vector.broadcast %cst_13 : f32 to vector<16x128xf32>
    %34 = arith.minimumf %29, %33 : vector<16x128xf32>
    %35 = vector.broadcast %30 : f32 to vector<16x128xf32>
    %36 = arith.mulf %35, %34 : vector<16x128xf32>
    %37 = arith.addf %32, %36 : vector<16x128xf32>
    %c0_14 = arith.constant 0 : index
    %c0_15 = arith.constant 0 : index
    %38 = vector.load %arg6[%c0_14, %c0_15] : memref<16x128xf32, #tpu.memory_space<vmem>>, vector<16x128xf32>
    tpu.vector_store %arg6[%c0_14, %c0_15], %37 {strides = array<i32>} : memref<16x128xf32, #tpu.memory_space<vmem>>, vector<16x128xf32>,
    return
  }
  func.func @transform_0(%arg0: i32) -> (i32, i32) {
    %c0_i32 = arith.constant 0 : i32
    %c0_i32_0 = arith.constant 0 : i32
    %c0_i32_1 = arith.constant 0 : i32
    return %c0_i32, %c0_i32_0 : i32, i32
  }
  func.func @transform_1(%arg0: i32) -> (i32, i32) {
    %c0_i32 = arith.constant 0 : i32
    %c0_i32_0 = arith.constant 0 : i32
    return %c0_i32, %arg0 : i32, i32
  }
  func.func @transform_2(%arg0: i32) -> (i32, i32) {
    %c0_i32 = arith.constant 0 : i32
    %c0_i32_0 = arith.constant 0 : i32
    return %c0_i32, %arg0 : i32, i32
  }
  func.func @transform_3(%arg0: i32) -> (i32, i32) {
    %c0_i32 = arith.constant 0 : i32
    %c0_i32_0 = arith.constant 0 : i32
    %c0_i32_1 = arith.constant 0 : i32
    return %c0_i32, %c0_i32_0 : i32, i32
  }
  func.func @transform_4(%arg0: i32) -> (i32, i32) {
    %c0_i32 = arith.constant 0 : i32
    %c0_i32_0 = arith.constant 0 : i32
    %c0_i32_1 = arith.constant 0 : i32
    return %c0_i32, %c0_i32_0 : i32, i32
  }
  func.func @transform_5(%arg0: i32) -> (i32, i32) {
    %c0_i32 = arith.constant 0 : i32
    %c0_i32_0 = arith.constant 0 : i32
    return %c0_i32, %arg0 : i32, i32
  }
}

</mosaic_0001>

<llo_original>
// kernel: tpu_custom_call.1
$region0: #{tpu_custom_call.1}
  #allocation0 [shape = 'u32[]', space=smem, size = 0x4, offset = 0x4, fixed_abs, tag = 'smem constant byte address 0x4 - core index']
  #allocation1 [shape = 'u32[144,128]{1,0:T(1,128)}', space=vmem, size = 0x12000, scoped, tag = 'internal scratch']
  #allocation2 [shape = 'f32[1,1]{1,0:T(1,128)S(6)}', space=smem, size = 0x200, scoped, tag = 'scoped memory for tpu_custom_call.1']
  %s0 = inlined_call_operand.vmem [shape: f32[16,32], index: 0, kind: input, shape index: {}]
  %s1 = inlined_call_operand.hbm [shape: f32[32,128], index: 1, kind: input, shape index: {}]
  %s2 = inlined_call_operand.vmem [shape: f32[3,128], index: 2, kind: input, shape index: {}]
  %s3 = inlined_call_operand.vmem [shape: f32[16,1], index: 3, kind: input, shape index: {}]
  %s4 = inlined_call_operand.<no memory space> [shape: f32[1,1], index: 4, kind: input, shape index: {}]
  %s5 = inlined_call_operand.hbm [shape: f32[16,128], index: 5, kind: output, shape index: {}]
  %s6 = sld [smem:[#allocation0]]
  $region34: #{tpu_custom_call.1} parent=0
    _
  %s8 = ssub.s32 1, %s6
  %s9 = scalar_select 0, %s8, %s6
  %10 = sst [smem:[#allocation2]] %s4
  $region1: #{tpu_custom_call.1} parent=0
    #allocation3 [shape = 'u8[16384]{0}', space=vmem, size = 0x4000, scoped, tag = 'input window, operand 1, single buffered']
    #allocation4 [shape = 's32[1]{0}', space=sflag, size = 0x4, scoped, tag = 'scoped memory for tpu_custom_call.1']
    #allocation5 [shape = 's32[1]{0}', space=sflag, size = 0x4, scoped, tag = 'scoped memory for tpu_custom_call.1']
    #allocation6 [shape = 'u8[8192]{0}', space=vmem, size = 0x2000, scoped, tag = 'output window, operand 0, single buffered']
    %11 = vsyncpa [#allocation4], 0
    %12 = vsyncpa [#allocation5], 0
    // Predicated region
    $region2: #{tpu_custom_call.1} parent=1 // pred_check
      _
    $region3: #{tpu_custom_call.1} parent=1 // pred_check_branch
      %14 = sbr.rel (0) target = $region5
    $region4: #{tpu_custom_call.1} parent=1 // pred_region
      _
    $region5: #{tpu_custom_call.1} parent=1 // pred_fallthru
      _
    // Predicated region
    $region6: #{tpu_custom_call.1} parent=1 // pred_check
      _
    $region7: #{tpu_custom_call.1} parent=1 // pred_check_branch
      %16 = sbr.rel (0) target = $region9
    $region8: #{tpu_custom_call.1} parent=1 // pred_region
      %s18 = ssub.s32 512, 512
      %19 = vsyncadd [#allocation4], %s18
      %s20 = sshll.u32 [#allocation3], 4
      %s21 = int_to_ptr.vmem [resolvable:$true] %s20
      %26 = dma.hbm_to_vmem [thread:$0]  %s1, 512, %s21, [#allocation4], 128, 128, 8
    $region9: #{tpu_custom_call.1} parent=1 // pred_fallthru
      _
    // Predicated region
    $region10: #{tpu_custom_call.1} parent=1 // pred_check
      _
    $region11: #{tpu_custom_call.1} parent=1 // pred_check_branch
      %28 = sbr.rel (0) target = $region13
    $region12: #{tpu_custom_call.1} parent=1 // pred_region
      _
    $region13: #{tpu_custom_call.1} parent=1 // pred_fallthru
      _
    // Predicated region
    $region14: #{tpu_custom_call.1} parent=1 // pred_check
      _
    $region15: #{tpu_custom_call.1} parent=1 // pred_check_branch
      %30 = sbr.rel (0) target = $region17
    $region16: #{tpu_custom_call.1} parent=1 // pred_region
      _
    $region17: #{tpu_custom_call.1} parent=1 // pred_fallthru
      _
    // Predicated region
    $region18: #{tpu_custom_call.1} parent=1 // pred_check
      _
    $region19: #{tpu_custom_call.1} parent=1 // pred_check_branch
      %32 = sbr.rel (0) target = $region21
    $region20: #{tpu_custom_call.1} parent=1 // pred_region
      _
    $region21: #{tpu_custom_call.1} parent=1 // pred_fallthru
      _
    // Predicated region
    $region22: #{tpu_custom_call.1} parent=1 // pred_check
      _
    $region23: #{tpu_custom_call.1} parent=1 // pred_check_branch
      %34 = sbr.rel (0) target = $region25
    $region24: #{tpu_custom_call.1} parent=1 // pred_region
      %35 = dma.done [#allocation4], 512
    $region25: #{tpu_custom_call.1} parent=1 // pred_fallthru
      _
    %v36 = vld [vmem:[%s2] sm:$0x7]
    %v37 = vld [vmem:[%s0] sm:$0xff]
    %v38 = vld [vmem:[%s0 + $0x8] sm:$0xff]
    %v39 = vld [vmem:[#allocation3] sm:$0xff]
    %v40 = vld [vmem:[#allocation3 + $0x8] sm:$0xff]
    %v41 = vld [vmem:[#allocation3 + $0x10] sm:$0xff]
    %v42 = vld [vmem:[#allocation3 + $0x18] sm:$0xff]
    %v43 = vlaneseq
    %v44 = vshrl.u32 %v43, 7
    %v45 = vsub.s32 0, %v44
    %v46 = vrot.slane %v36, %v45
    %vm47 = vcmask 261120
    %v49 = vsel %vm47, %v37, 0
    %v52 = vsel %vm47, %v38, 0
    %54 = vmatprep.subr.mxu0 0.0
    %55 = vmatpush1.msra.mxu0 %v39
    %56 = vmatprep.subr.mxu0 0.0
    %57 = vmatpush1.msra.mxu0 %v40
    %58 = vmatprep.subr.mxu0 0.0
    %59 = vmatpush1.msra.mxu0 %v41
    %60 = vmatprep.subr.mxu0 0.0
    %61 = vmatpush1.msra.mxu0 %v42
    %62 = vmatprep.subr.mxu0 0.0
    %63 = vmatpush1.msra.mxu0 0.0
    %64 = vmatprep.subr.mxu0 0.0
    %65 = vmatpush1.msra.mxu0 0.0
    %66 = vmatprep.subr.mxu0 0.0
    %67 = vmatpush1.msra.mxu0 0.0
    %68 = vmatprep.subr.mxu0 0.0
    %69 = vmatpush1.msra.mxu0 0.0
    %70 = vmatprep.subr.mxu0 0.0
    %71 = vmatpush1.msra.mxu0 0.0
    %72 = vmatprep.subr.mxu0 0.0
    %73 = vmatpush1.msra.mxu0 0.0
    %74 = vmatprep.subr.mxu0 0.0
    %75 = vmatpush1.msra.mxu0 0.0
    %76 = vmatprep.subr.mxu0 0.0
    %77 = vmatpush1.msra.mxu0 0.0
    %78 = vmatprep.subr.mxu0 0.0
    %79 = vmatpush1.msra.mxu0 0.0
    %80 = vmatprep.subr.mxu0 0.0
    %81 = vmatpush1.msra.mxu0 0.0
    %82 = vmatprep.subr.mxu0 0.0
    %83 = vmatpush1.msra.mxu0 0.0
    %84 = vmatprep.subr.mxu0 0.0
    %85 = vmatpush1.msra.mxu0 0.0
    %86 = vmatprep.subr.mxu0 0.0
    %87 = vmatpush1.msra.mxu0 0.0
    %88 = vmatprep.subr.mxu0 0.0
    %89 = vmatpush1.msra.mxu0 0.0
    %90 = vmatprep.subr.mxu0 0.0
    %91 = vmatpush1.msra.mxu0 0.0
    %92 = vmatprep.subr.mxu0 0.0
    %93 = vmatpush1.msra.mxu0 0.0
    %94 = vmatprep.subr.mxu0 0.0
    %95 = vmatpush1.msra.mxu0 0.0
    %96 = vmatprep.subr.mxu0 0.0
    %97 = vmatpush1.msra.mxu0 0.0
    %98 = vmatprep.subr.mxu0 0.0
    %99 = vmatpush1.msra.mxu0 0.0
    %100 = vmatprep.subr.mxu0 0.0
    %101 = vmatpush1.msra.mxu0 0.0
    %102 = vmatprep.subr.mxu0 0.0
    %103 = vmatpush1.msra.mxu0 0.0
    %104 = vmatprep.subr.mxu0 0.0
    %105 = vmatpush1.msra.mxu0 0.0
    %106 = vmatprep.subr.mxu0 0.0
    %107 = vmatpush1.msra.mxu0 0.0
    %108 = vmatprep.subr.mxu0 0.0
    %109 = vmatpush1.msra.mxu0 0.0
    %110 = vmatprep.subr.mxu0 0.0
    %111 = vmatpush1.msra.mxu0 0.0
    %112 = vmatprep.subr.mxu0 0.0
    %113 = vmatpush1.msra.mxu0 0.0
    %114 = vmatprep.subr.mxu0 0.0
    %115 = vmatpush1.msra.mxu0 0.0
    %116 = vmatprep.subr.mxu0 0.0
    %117 = vmatpush1.msra.mxu0 0.0
    %118 = vmatprep.mubr.f32.mxu0 0.0
    %119 = vmatmul.mubr.f32.gmra.mrb[0].mxu0 %v49
    %v120 = vpop.f32.mrb[0].mxu0
    %v121 = vadd.f32 %v46, %v120
    %v122 = vpop.f32.mrb[0].mxu0
    %123 = vmatprep.mubr.f32.mxu0 0.0
    %124 = vmatmul.mubr.f32.gmra.mrb[0].mxu0 %v52
    %v125 = vpop.f32.mrb[0].mxu0
    %v126 = vadd.f32 %v46, %v125
    %v127 = vpop.f32.mrb[0].mxu0
    %128 = vdwg.mxu0
    %v129 = vadd.f32 %v121, %v126
    %v130 = vrot.slane %v129, 4
    %v131 = vadd.f32 %v129, %v130
    %v132 = vrot.slane %v131, 2
    %v133 = vadd.f32 %v131, %v132
    %v134 = vrot.slane %v133, 1
    %v135 = vadd.f32 %v133, %v134
    %v136 = vmul.f32 %v135, 0.0625
    %v137 = vsub.f32 %v121, %v136
    %v138 = vsub.f32 %v126, %v136
    %v139 = vmul.f32 %v137, %v137
    %v140 = vmul.f32 %v138, %v138
    %v141 = vadd.f32 %v139, %v140
    %v142 = vrot.slane %v141, 4
    %v143 = vadd.f32 %v141, %v142
    %v144 = vrot.slane %v143, 2
    %v145 = vadd.f32 %v143, %v144
    %v146 = vrot.slane %v145, 1
    %v147 = vadd.f32 %v145, %v146
    %v148 = vmul.f32 %v147, 0.0625
    %v149 = vadd.f32 %v148, 1e-05
    %v150 = vrsqrt.pop %v149
    %v151 = vmul.f32 %v36, %v150
    %v152 = vmul.f32 %v136, %v151
    %v154 = vrot.slane %v152, 7
    %v156 = vsub.f32 %v36, %v154
    %v157 = vlaneseq
    %v158 = vshrl.u32 %v157, 7
    %v159 = vsub.s32 1, %v158
    %v160 = vrot.slane %v151, %v159
    %v161 = vmul.f32 %v121, %v160
    %v162 = vmul.f32 %v126, %v160
    %v163 = vlaneseq
    %v164 = vshrl.u32 %v163, 7
    %v165 = vsub.s32 2, %v164
    %v166 = vrot.slane %v156, %v165
    %v167 = vadd.f32 %v161, %v166
    %v168 = vadd.f32 %v162, %v166
    %s169 = sld [smem:[#allocation2]]
    %v170 = vmax.f32 %v167, 0.0
    %v171 = vmax.f32 %v168, 0.0
    %v172 = vmin.f32 %v167, 0.0
    %v173 = vmin.f32 %v168, 0.0
    %v174 = vstv %s169
    %v175 = vmul.f32 %v174, %v172
    %v176 = vmul.f32 %v174, %v173
    %v177 = vadd.f32 %v170, %v175
    %v178 = vadd.f32 %v171, %v176
    %179 = vst [vmem:[#allocation6] sm:$0xff] %v177
    %180 = vst [vmem:[#allocation6 + $0x8] sm:$0xff] %v178
    // Predicated region
    $region26: #{tpu_custom_call.1} parent=1 // pred_check
      _
    $region27: #{tpu_custom_call.1} parent=1 // pred_check_branch
      %182 = sbr.rel (0) target = $region29
    $region28: #{tpu_custom_call.1} parent=1 // pred_region
      %s184 = ssub.s32 256, 256
      %185 = vsyncadd [#allocation5], %s184
      %s186 = sshll.u32 [#allocation6], 4
      %s187 = int_to_ptr.vmem [resolvable:$true] %s186
      %192 = dma.vmem_to_hbm [thread:$0]  %s187, 256, %s5, [#allocation5], 128, 128, 8
    $region29: #{tpu_custom_call.1} parent=1 // pred_fallthru
      _
    // Predicated region
    $region30: #{tpu_custom_call.1} parent=1 // pred_check
      _
    $region31: #{tpu_custom_call.1} parent=1 // pred_check_branch
      %194 = sbr.rel (0) target = $region33
    $region32: #{tpu_custom_call.1} parent=1 // pred_region
      %195 = dma.done [#allocation5], 256
    $region33: #{tpu_custom_call.1} parent=1 // pred_fallthru
      _
    %196 = vsyncpa [#allocation4], 1
    %197 = vsyncpa [#allocation5], 1

</llo_original>
